<compile_context>
chip_gen: v7x
topology: tpu7x:2x2x1
jax: 0.10.0
libtpu: 0.0.40
codegen_flags: <defaults>
</compile_context>

<pallas_src>
import jax
import jax.numpy as jnp
from jax.experimental import pallas as pl
from jax.experimental.pallas import tpu as pltpu


def _round_up(x, m):
    return ((x + m - 1) // m) * m


def make_cnn_kernel(first_masked_chunk):
    """Streaming conv(matmul) + running time-max + bias/ReLU + FC kernel body."""

    def kernel(x_ref, w_ref, mask_ref, bias_ref, fcw_ref, fcb_ref, out_ref,
               pmax_ref):
        t = pl.program_id(1)

        @pl.when(t == 0)
        def _():
            pmax_ref[...] = jnp.full_like(pmax_ref, -3.0e38)

        tb, tl, kp = x_ref.shape
        # One MXU matmul for ALL filter sizes of this (batch, time) chunk:
        # bf16 operands (no f32 im2col round-trip), f32 accumulation.
        x2d = x_ref[...].reshape(tb * tl, kp)
        conv = jnp.dot(x2d, w_ref[...], preferred_element_type=jnp.float32)
        conv = conv.reshape(tb, tl, w_ref.shape[1])

        # Running max over time.  The -1e30 validity mask (per-branch tail
        # positions + time padding) is only applied on tail chunks; earlier
        # chunks skip that whole VPU pass.
        @pl.when(t < first_masked_chunk)
        def _():
            pmax_ref[...] = jnp.maximum(pmax_ref[...], jnp.max(conv, axis=1))

        @pl.when(t >= first_masked_chunk)
        def _():
            masked = conv + mask_ref[...][None, :, :]
            pmax_ref[...] = jnp.maximum(pmax_ref[...], jnp.max(masked, axis=1))

        @pl.when(t == pl.num_programs(1) - 1)
        def _():
            # Conv bias + ReLU folded to after the masked max-pool
            # (numerically identical: max/relu commute with a constant shift).
            pooled = jnp.maximum(pmax_ref[...] + bias_ref[...], 0.0)
            # TODO(synk): dropout is identity in eval mode; training-mode RNG
            # dropout is not implemented.
            logits = jnp.dot(pooled.astype(jnp.bfloat16), fcw_ref[...],
                             preferred_element_type=jnp.float32) + fcb_ref[...]
            out_ref[...] = logits.astype(out_ref.dtype)

    return kernel


def cnn_forward(token_ids, params, filter_sizes, num_filters, num_classes,
                batch_tile=64, time_tile=256):
    """Full forward pass: embedding gather + im2col + packing (glue) + Pallas kernel."""
    filter_sizes = tuple(filter_sizes)
    n_f = len(filter_sizes)
    f = num_filters
    k_max = max(filter_sizes)
    k_min = min(filter_sizes)

    emb_table = params["embedding"]                        # [V, E] (row 0 zero)
    embedded = jnp.take(emb_table, token_ids, axis=0)      # [B, L, E] f32
    B, L, E = embedded.shape
    lout = L - k_min + 1
    assert lout >= 1, "sequence shorter than the smallest filter"

    n = n_f * f
    n_pad = _round_up(n, 128)            # lane-dense conv output / FC input
    c_pad = _round_up(num_classes, 128)  # lane-dense logits
    K = k_max * E
    K_pad = _round_up(K, 128)            # lane-dense im2col feature axis

    # Time tiling: multiple of 16 (bf16 sublane packing); streaming chunk size.
    tL = min(_round_up(time_tile, 16), _round_up(lout, 16))
    lt_pad = _round_up(lout, tL)
    nt = lt_pad // tL

    # Batch tiling: guarantee >= 2 grid steps so "parallel" splits across
    # v7x's two TensorCores even for small B.
    tb = max(8, min(batch_tile, _round_up(-(-B // 2), 8)))
    b_pad = _round_up(B, tb)
    if b_pad // tb < 2:
        b_pad = 2 * tb
    nb = b_pad // tb

    # Wrapper-side im2col in bf16: concat the k_max shifted embedding windows
    # along the feature axis -> lane-dense [b_pad, lt_pad, K_pad] operand.
    emb_b = embedded.astype(jnp.bfloat16)
    emb_b = jnp.pad(emb_b, ((0, 0), (0, (lout + k_max - 1) - L), (0, 0)))
    x_cat = jnp.concatenate(
        [emb_b[:, dk:dk + lout, :] for dk in range(k_max)], axis=-1)
    x_cat = jnp.pad(
        x_cat, ((0, b_pad - B), (0, lt_pad - lout), (0, K_pad - K)))

    # Stack all filter banks into one [K_pad, n_pad] matrix (zero rows on
    # unused taps / padded columns), stacked bias, and per-branch validity mask.
    w_stack = jnp.zeros((k_max, E, n_pad), jnp.float32)
    b_stack = jnp.zeros((1, n_pad), jnp.float32)
    mask = jnp.zeros((lt_pad, n_pad), jnp.float32)
    pos = jnp.arange(lt_pad)[:, None]
    for i, k in enumerate(filter_sizes):
        w_stack = w_stack.at[:k, :, i * f:(i + 1) * f].set(params[f"conv{i}_w"])
        b_stack = b_stack.at[:, i * f:(i + 1) * f].set(params[f"conv{i}_b"])
        lo_i = L - k + 1
        col = jnp.where(pos >= lo_i, -1e30, 0.0).astype(jnp.float32)
        mask = mask.at[:, i * f:(i + 1) * f].set(
            jnp.broadcast_to(col, (lt_pad, f)))
    w_flat = w_stack.reshape(K, n_pad)
    w_flat = jnp.pad(w_flat, ((0, K_pad - K), (0, 0))).astype(jnp.bfloat16)

    fc_w = jnp.zeros((n_pad, c_pad), jnp.float32)
    fc_w = fc_w.at[:n, :num_classes].set(params["fc_w"]).astype(jnp.bfloat16)
    fc_b = jnp.zeros((1, c_pad), jnp.float32)
    fc_b = fc_b.at[:, :num_classes].set(params["fc_b"])

    # Masking is needed only from the first position invalid for the largest
    # filter onwards (plus time padding) -- all in the tail chunks.
    first_invalid_pos = L - k_max + 1
    if first_invalid_pos >= lt_pad:
        first_masked_chunk = nt            # nothing to mask
    else:
        first_masked_chunk = max(0, first_invalid_pos) // tL

    # Explicit VMEM budget (v7x: 64 MiB physical, 32 MiB default scoped limit).
    est = (2 * tb * tL * K_pad * 2        # x chunk (bf16), double buffered
           + 2 * tL * n_pad * 4           # mask chunk
           + 2 * K_pad * n_pad * 2        # stacked conv weights (bf16)
           + 2 * n_pad * 4                # conv bias
           + 2 * n_pad * c_pad * 2        # fc weight (bf16)
           + 2 * c_pad * 4                # fc bias
           + 2 * tb * c_pad * 4           # output tile
           + tb * n_pad * 4               # running-max scratch
           + tb * tL * n_pad * 4          # conv f32 intermediate
           + tb * tL * K_pad * 2)         # reshape/copy slack
    vmem_limit = min(max(2 * est, 32 << 20), 64 << 20)

    kernel = make_cnn_kernel(first_masked_chunk)

    out = pl.pallas_call(
        kernel,
        out_shape=jax.ShapeDtypeStruct((b_pad, c_pad), jnp.float32),
        grid_spec=pltpu.PrefetchScalarGridSpec(
            num_scalar_prefetch=0,
            grid=(nb, nt),
            in_specs=[
                pl.BlockSpec((tb, tL, K_pad), lambda i, t: (i, t, 0)),  # im2col chunk
                pl.BlockSpec((K_pad, n_pad), lambda i, t: (0, 0)),      # stacked conv weights
                pl.BlockSpec((tL, n_pad), lambda i, t: (t, 0)),         # validity mask chunk
                pl.BlockSpec((1, n_pad), lambda i, t: (0, 0)),          # stacked conv bias
                pl.BlockSpec((n_pad, c_pad), lambda i, t: (0, 0)),      # fc weight
                pl.BlockSpec((1, c_pad), lambda i, t: (0, 0)),          # fc bias
            ],
            out_specs=pl.BlockSpec((tb, c_pad), lambda i, t: (i, 0)),
            scratch_shapes=[pltpu.VMEM((tb, n_pad), jnp.float32)],      # running max
        ),
        compiler_params=pltpu.CompilerParams(
            dimension_semantics=("parallel", "arbitrary"),
            vmem_limit_bytes=vmem_limit),
    )(x_cat, w_flat, mask, b_stack, fc_w, fc_b)

    return out[:B, :num_classes]


def init_params(key, vocab_size, embedding_dim, filter_sizes, num_filters, num_classes):
    keys = jax.random.split(key, 2 * len(filter_sizes) + 3)
    params = {}

    emb = 0.02 * jax.random.normal(keys[0], (vocab_size, embedding_dim), jnp.float32)
    emb = emb.at[0].set(0.0)  # padding_idx=0
    params["embedding"] = emb

    for i, k in enumerate(filter_sizes):
        wk = jax.random.normal(keys[1 + 2 * i], (k, embedding_dim, num_filters),
                               jnp.float32) * (1.0 / jnp.sqrt(embedding_dim * k))
        bk = 0.01 * jax.random.normal(keys[2 + 2 * i], (1, num_filters), jnp.float32)
        params[f"conv{i}_w"] = wk
        params[f"conv{i}_b"] = bk

    fc_in = len(filter_sizes) * num_filters
    params["fc_w"] = jax.random.normal(keys[-2], (fc_in, num_classes),
                                       jnp.float32) * (1.0 / jnp.sqrt(fc_in))
    params["fc_b"] = 0.01 * jax.random.normal(keys[-1], (1, num_classes), jnp.float32)
    return params


def reference_forward(token_ids, params, filter_sizes, num_filters, num_classes,
                      compute_dtype=jnp.float32):
    """Plain-JAX reference mirroring the PyTorch forward (eval mode).

    compute_dtype controls matmul-operand precision (f32 = exact module
    semantics; bf16 mirrors the kernel's MXU-input quantization)."""
    embedded = jnp.take(params["embedding"], token_ids, axis=0)  # [B, L, E]
    B, L, E = embedded.shape
    emb_c = embedded.astype(compute_dtype)
    pooled_parts = []
    for i, k in enumerate(filter_sizes):
        w = params[f"conv{i}_w"].astype(compute_dtype)   # [k, E, F]
        b = params[f"conv{i}_b"]                         # [1, F]
        l_out = L - k + 1
        acc = jnp.zeros((B, l_out, num_filters), jnp.float32)
        for dk in range(k):
            acc = acc + jnp.einsum("ble,ef->blf", emb_c[:, dk:dk + l_out, :], w[dk],
                                   preferred_element_type=jnp.float32)
        acc = jnp.maximum(acc + b.reshape(1, 1, num_filters), 0.0)
        pooled_parts.append(jnp.max(acc, axis=1))
    concatenated = jnp.concatenate(pooled_parts, axis=1)
    return (jnp.dot(concatenated.astype(compute_dtype),
                    params["fc_w"].astype(compute_dtype),
                    preferred_element_type=jnp.float32)
            + params["fc_b"])


def _check(token_ids, params, filter_sizes, num_filters, num_classes, **kw):
    out = cnn_forward(token_ids, params, filter_sizes, num_filters, num_classes, **kw)
    out = jax.block_until_ready(out)
    assert out.shape == (token_ids.shape[0], num_classes)

    # Tight check vs a reference using the same bf16-operand / f32-accum quantization.
    ref_bf16 = reference_forward(token_ids, params, filter_sizes, num_filters,
                                 num_classes, compute_dtype=jnp.bfloat16)
    assert jnp.allclose(out, ref_bf16, atol=2e-3, rtol=1e-2), \
        float(jnp.max(jnp.abs(out - ref_bf16)))

    # Loose check vs exact f32 module semantics (difference = bf16 quantization noise).
    ref_f32 = reference_forward(token_ids, params, filter_sizes, num_filters,
                                num_classes, compute_dtype=jnp.float32)
    assert jnp.allclose(out, ref_f32, atol=2e-2, rtol=2e-2), \
        float(jnp.max(jnp.abs(out - ref_f32)))
    return out


if __name__ == "__main__":
    # Small, module-consistent shapes.
    vocab_size = 64
    embedding_dim = 32
    filter_sizes = [2, 3, 4]
    num_filters = 16
    num_classes = 4

    key = jax.random.PRNGKey(0)
    k_param, k_data1, k_data2 = jax.random.split(key, 3)

    params = init_params(k_param, vocab_size, embedding_dim, filter_sizes,
                         num_filters, num_classes)

    # Case 1: tiny batch / short sequence (single time chunk).
    tok1 = jax.random.randint(k_data1, (2, 8), 0, vocab_size, dtype=jnp.int32)
    _check(tok1, params, filter_sizes, num_filters, num_classes)

    # Case 2: longer sequence with a small time tile to exercise the streaming
    # running-max path (multiple time chunks, mask applied only on the tail chunk).
    tok2 = jax.random.randint(k_data2, (5, 40), 0, vocab_size, dtype=jnp.int32)
    _check(tok2, params, filter_sizes, num_filters, num_classes, time_tile=16)

    print("KERNEL_OK")
</pallas_src>

<mosaic_0001>
module attributes {stable_mosaic.version = 11 : i64} {
  func.func @kernel(%arg0: i32, %arg1: i32, %arg2: memref<8x16x128xbf16, #tpu.memory_space<vmem>>, %arg3: memref<128x128xbf16, #tpu.memory_space<vmem>>, %arg4: memref<16x128xf32, #tpu.memory_space<vmem>>, %arg5: memref<1x128xf32, #tpu.memory_space<vmem>>, %arg6: memref<128x128xbf16, #tpu.memory_space<vmem>>, %arg7: memref<1x128xf32, #tpu.memory_space<vmem>>, %arg8: memref<8x128xf32, #tpu.memory_space<vmem>>, %arg9: memref<8x128xf32, #tpu.memory_space<vmem>>) attributes {dimension_semantics = [#tpu.dimension_semantics<parallel>, #tpu.dimension_semantics<arbitrary>], iteration_bounds = array<i64: 2, 1>, scalar_prefetch = 0 : i64, scratch_operands = 1 : i64, tpu.core_type = #tpu.core_type<tc>, window_params = [{transform_indices = @transform_0, window_bounds = array<i64: 8, 16, 128>}, {pipeline_mode = #tpu.pipeline_mode<synchronous>, transform_indices = @transform_1, window_bounds = array<i64: 128, 128>}, {transform_indices = @transform_2, window_bounds = array<i64: 16, 128>}, {pipeline_mode = #tpu.pipeline_mode<synchronous>, transform_indices = @transform_3, window_bounds = array<i64: 1, 128>}, {pipeline_mode = #tpu.pipeline_mode<synchronous>, transform_indices = @transform_4, window_bounds = array<i64: 128, 128>}, {pipeline_mode = #tpu.pipeline_mode<synchronous>, transform_indices = @transform_5, window_bounds = array<i64: 1, 128>}, {transform_indices = @transform_6, window_bounds = array<i64: 8, 128>}]} {
    %c0_i32 = arith.constant 0 : i32
    %0 = arith.cmpi eq, %arg1, %c0_i32 : i32
    %1 = arith.extui %0 : i1 to i32
    %c0_i32_0 = arith.constant 0 : i32
    %2 = arith.cmpi ne, %1, %c0_i32_0 : i32
    scf.if %2 {
      %cst_11 = arith.constant -3.000000e+38 : f32
      %17 = vector.broadcast %cst_11 : f32 to vector<8x128xf32>
      %c0_12 = arith.constant 0 : index
      %c0_13 = arith.constant 0 : index
      %18 = vector.load %arg9[%c0_12, %c0_13] : memref<8x128xf32, #tpu.memory_space<vmem>>, vector<8x128xf32>
      tpu.vector_store %arg9[%c0_12, %c0_13], %17 {strides = array<i32>} : memref<8x128xf32, #tpu.memory_space<vmem>>, vector<8x128xf32>,
    } else {
    }
    %c0 = arith.constant 0 : index
    %c0_1 = arith.constant 0 : index
    %c0_2 = arith.constant 0 : index
    %3 = vector.load %arg2[%c0, %c0_1, %c0_2] : memref<8x16x128xbf16, #tpu.memory_space<vmem>>, vector<8x16x128xbf16>
    %4 = vector.shape_cast %3 : vector<8x16x128xbf16> to vector<128x128xbf16>
    %c0_3 = arith.constant 0 : index
    %c0_4 = arith.constant 0 : index
    %5 = vector.load %arg3[%c0_3, %c0_4] : memref<128x128xbf16, #tpu.memory_space<vmem>>, vector<128x128xbf16>
    %cst = arith.constant dense<0.000000e+00> : vector<128x128xf32>
    %6 = tpu.matmul %4, %5, %cst {dimension_numbers = #tpu.dot_dimension_numbers<[1], [0], [0], [1], [0, 0, 1, 1], [], []>} : vector<128x128xbf16>, vector<128x128xbf16>, vector<128x128xf32> -> vector<128x128xf32>
    %7 = vector.shape_cast %6 : vector<128x128xf32> to vector<8x16x128xf32>
    %c0_i32_5 = arith.constant 0 : i32
    %8 = arith.cmpi slt, %arg1, %c0_i32_5 : i32
    %9 = arith.extui %8 : i1 to i32
    %c0_i32_6 = arith.constant 0 : i32
    %10 = arith.cmpi ne, %9, %c0_i32_6 : i32
    scf.if %10 {
      %c0_11 = arith.constant 0 : index
      %c0_12 = arith.constant 0 : index
      %17 = vector.load %arg9[%c0_11, %c0_12] : memref<8x128xf32, #tpu.memory_space<vmem>>, vector<8x128xf32>
      %cst_13 = arith.constant dense<0xFF800000> : vector<8x128xf32>
      %18 = vector.multi_reduction <maximumf>, %7, %cst_13 [1] : vector<8x16x128xf32> to vector<8x128xf32>
      %19 = arith.maximumf %17, %18 : vector<8x128xf32>
      %c0_14 = arith.constant 0 : index
      %c0_15 = arith.constant 0 : index
      %20 = vector.load %arg9[%c0_14, %c0_15] : memref<8x128xf32, #tpu.memory_space<vmem>>, vector<8x128xf32>
      tpu.vector_store %arg9[%c0_14, %c0_15], %19 {strides = array<i32>} : memref<8x128xf32, #tpu.memory_space<vmem>>, vector<8x128xf32>,
    } else {
    }
    %c0_i32_7 = arith.constant 0 : i32
    %11 = arith.cmpi sge, %arg1, %c0_i32_7 : i32
    %12 = arith.extui %11 : i1 to i32
    %c0_i32_8 = arith.constant 0 : i32
    %13 = arith.cmpi ne, %12, %c0_i32_8 : i32
    scf.if %13 {
      %c0_11 = arith.constant 0 : index
      %c0_12 = arith.constant 0 : index
      %17 = vector.load %arg4[%c0_11, %c0_12] : memref<16x128xf32, #tpu.memory_space<vmem>>, vector<16x128xf32>
      %18 = vector.shape_cast %17 : vector<16x128xf32> to vector<1x16x128xf32>
      %19 = vector.broadcast %18 : vector<1x16x128xf32> to vector<8x16x128xf32>
      %20 = arith.addf %7, %19 : vector<8x16x128xf32>
      %c0_13 = arith.constant 0 : index
      %c0_14 = arith.constant 0 : index
      %21 = vector.load %arg9[%c0_13, %c0_14] : memref<8x128xf32, #tpu.memory_space<vmem>>, vector<8x128xf32>
      %cst_15 = arith.constant dense<0xFF800000> : vector<8x128xf32>
      %22 = vector.multi_reduction <maximumf>, %20, %cst_15 [1] : vector<8x16x128xf32> to vector<8x128xf32>
      %23 = arith.maximumf %21, %22 : vector<8x128xf32>
      %c0_16 = arith.constant 0 : index
      %c0_17 = arith.constant 0 : index
      %24 = vector.load %arg9[%c0_16, %c0_17] : memref<8x128xf32, #tpu.memory_space<vmem>>, vector<8x128xf32>
      tpu.vector_store %arg9[%c0_16, %c0_17], %23 {strides = array<i32>} : memref<8x128xf32, #tpu.memory_space<vmem>>, vector<8x128xf32>,
    } else {
    }
    %c0_i32_9 = arith.constant 0 : i32
    %14 = arith.cmpi eq, %arg1, %c0_i32_9 : i32
    %15 = arith.extui %14 : i1 to i32
    %c0_i32_10 = arith.constant 0 : i32
    %16 = arith.cmpi ne, %15, %c0_i32_10 : i32
    scf.if %16 {
      %c0_11 = arith.constant 0 : index
      %c0_12 = arith.constant 0 : index
      %17 = vector.load %arg9[%c0_11, %c0_12] : memref<8x128xf32, #tpu.memory_space<vmem>>, vector<8x128xf32>
      %c0_13 = arith.constant 0 : index
      %c0_14 = arith.constant 0 : index
      %18 = vector.load %arg5[%c0_13, %c0_14] : memref<1x128xf32, #tpu.memory_space<vmem>>, vector<1x128xf32>
      %19 = vector.broadcast %18 : vector<1x128xf32> to vector<8x128xf32>
      %20 = arith.addf %17, %19 : vector<8x128xf32>
      %cst_15 = arith.constant 0.000000e+00 : f32
      %21 = vector.broadcast %cst_15 : f32 to vector<8x128xf32>
      %22 = arith.maximumf %20, %21 : vector<8x128xf32>
      %23 = arith.truncf %22 : vector<8x128xf32> to vector<8x128xbf16>
      %c0_16 = arith.constant 0 : index
      %c0_17 = arith.constant 0 : index
      %24 = vector.load %arg6[%c0_16, %c0_17] : memref<128x128xbf16, #tpu.memory_space<vmem>>, vector<128x128xbf16>
      %cst_18 = arith.constant dense<0.000000e+00> : vector<8x128xf32>
      %25 = tpu.matmul %23, %24, %cst_18 {dimension_numbers = #tpu.dot_dimension_numbers<[1], [0], [0], [1], [0, 0, 1, 1], [], []>} : vector<8x128xbf16>, vector<128x128xbf16>, vector<8x128xf32> -> vector<8x128xf32>
      %c0_19 = arith.constant 0 : index
      %c0_20 = arith.constant 0 : index
      %26 = vector.load %arg7[%c0_19, %c0_20] : memref<1x128xf32, #tpu.memory_space<vmem>>, vector<1x128xf32>
      %27 = vector.broadcast %26 : vector<1x128xf32> to vector<8x128xf32>
      %28 = arith.addf %25, %27 : vector<8x128xf32>
      %c0_21 = arith.constant 0 : index
      %c0_22 = arith.constant 0 : index
      %29 = vector.load %arg8[%c0_21, %c0_22] : memref<8x128xf32, #tpu.memory_space<vmem>>, vector<8x128xf32>
      tpu.vector_store %arg8[%c0_21, %c0_22], %28 {strides = array<i32>} : memref<8x128xf32, #tpu.memory_space<vmem>>, vector<8x128xf32>,
    } else {
    }
    return
  }
  func.func @transform_0(%arg0: i32, %arg1: i32) -> (i32, i32, i32) {
    %c0_i32 = arith.constant 0 : i32
    %c0_i32_0 = arith.constant 0 : i32
    return %arg0, %arg1, %c0_i32 : i32, i32, i32
  }
  func.func @transform_1(%arg0: i32, %arg1: i32) -> (i32, i32) {
    %c0_i32 = arith.constant 0 : i32
    %c0_i32_0 = arith.constant 0 : i32
    %c0_i32_1 = arith.constant 0 : i32
    return %c0_i32, %c0_i32_0 : i32, i32
  }
  func.func @transform_2(%arg0: i32, %arg1: i32) -> (i32, i32) {
    %c0_i32 = arith.constant 0 : i32
    %c0_i32_0 = arith.constant 0 : i32
    return %arg1, %c0_i32 : i32, i32
  }
  func.func @transform_3(%arg0: i32, %arg1: i32) -> (i32, i32) {
    %c0_i32 = arith.constant 0 : i32
    %c0_i32_0 = arith.constant 0 : i32
    %c0_i32_1 = arith.constant 0 : i32
    return %c0_i32, %c0_i32_0 : i32, i32
  }
  func.func @transform_4(%arg0: i32, %arg1: i32) -> (i32, i32) {
    %c0_i32 = arith.constant 0 : i32
    %c0_i32_0 = arith.constant 0 : i32
    %c0_i32_1 = arith.constant 0 : i32
    return %c0_i32, %c0_i32_0 : i32, i32
  }
  func.func @transform_5(%arg0: i32, %arg1: i32) -> (i32, i32) {
    %c0_i32 = arith.constant 0 : i32
    %c0_i32_0 = arith.constant 0 : i32
    %c0_i32_1 = arith.constant 0 : i32
    return %c0_i32, %c0_i32_0 : i32, i32
  }
  func.func @transform_6(%arg0: i32, %arg1: i32) -> (i32, i32) {
    %c0_i32 = arith.constant 0 : i32
    %c0_i32_0 = arith.constant 0 : i32
    return %arg0, %c0_i32 : i32, i32
  }
}

</mosaic_0001>

<llo_original>
// kernel: tpu_custom_call.1
$region0: #{tpu_custom_call.1}
  #allocation0 [shape = 'u32[]', space=smem, size = 0x4, offset = 0x4, fixed_abs, tag = 'smem constant byte address 0x4 - core index']
  #allocation1 [shape = 'u32[144,128]{1,0:T(1,128)}', space=vmem, size = 0x12000, scoped, tag = 'internal scratch']
  #allocation2 [shape = 'f32[8,128]{1,0:T(8,128)}', space=vmem, size = 0x1000, scoped, tag = 'scratch operand']
  %s0 = inlined_call_operand.hbm [shape: bf16[16,16,128], index: 0, kind: input, shape index: {}]
  %s1 = inlined_call_operand.hbm [shape: bf16[128,128], index: 1, kind: input, shape index: {}]
  %s2 = inlined_call_operand.hbm [shape: f32[16,128], index: 2, kind: input, shape index: {}]
  %s3 = inlined_call_operand.vmem [shape: f32[1,128], index: 3, kind: input, shape index: {}]
  %s4 = inlined_call_operand.hbm [shape: bf16[128,128], index: 4, kind: input, shape index: {}]
  %s5 = inlined_call_operand.vmem [shape: f32[1,128], index: 5, kind: input, shape index: {}]
  %s6 = inlined_call_operand.hbm [shape: f32[16,128], index: 6, kind: output, shape index: {}]
  %s7 = sld [smem:[#allocation0]]
  $region89: #{tpu_custom_call.1} parent=0
    _
  %s9 = ssub.s32 1, %s7
  %s10 = scalar_select 0, %s9, %s7
  $region1: #{tpu_custom_call.1} parent=0
    #allocation3 [shape = 'u8[65536]{0}', space=vmem, size = 0x10000, scoped, tag = 'input window, operand 0']
    #allocation4 [shape = 's32[2]{0}', space=sflag, size = 0x8, scoped, tag = 'scoped memory for tpu_custom_call.1']
    #allocation5 [shape = 's32[2]{0}', space=sflag, size = 0x8, scoped, tag = 'scoped memory for tpu_custom_call.1']
    #allocation6 [shape = 'u8[32768]{0}', space=vmem, size = 0x8000, scoped, tag = 'input window, operand 1, single buffered']
    #allocation7 [shape = 's32[1]{0}', space=sflag, size = 0x4, scoped, tag = 'scoped memory for tpu_custom_call.1']
    #allocation8 [shape = 'u8[8192]{0}', space=vmem, size = 0x2000, scoped, tag = 'input window, operand 2, single buffered']
    #allocation9 [shape = 'u8[32768]{0}', space=vmem, size = 0x8000, scoped, tag = 'input window, operand 4, single buffered']
    #allocation10 [shape = 's32[1]{0}', space=sflag, size = 0x4, scoped, tag = 'scoped memory for tpu_custom_call.1']
    #allocation11 [shape = 'u8[8192]{0}', space=vmem, size = 0x2000, scoped, tag = 'output window, operand 0']
    %11 = vsyncpa [#allocation4], 0
    %s12 = scalar_lea.sflag [#allocation4], 1
    %13 = vsyncpa %s12, 0
    %14 = vsyncpa [#allocation7], 0
    %15 = vsyncpa [#allocation10], 0
    %16 = vsyncpa [#allocation5], 0
    %s17 = scalar_lea.sflag [#allocation5], 1
    %18 = vsyncpa %s17, 0
    loop: start=0, step=1, limit=4
    $region2: #{tpu_custom_call.1} parent=1 // loop_pre_header
      _
    $region3: #{tpu_custom_call.1} parent=1 // loop_header
      %s20 = sphi 0, %s24
      %p21 = scmp.ge.s32.totalorder %s20, 4
      %s27 = sphi 0, %s39
      %s28 = sphi 0, %s35
      %s29 = sphi 0, %s27
      %s30 = sphi 0, %s28
      %s31 = sphi 0, %s29
      %s32 = sphi 0, %s30
      %s44 = sphi 0, %s46
      %s47 = sphi 0, %s44
      %s48 = sphi 0, %s47
      %s64 = sphi 0, %s48
      %s68 = sphi 0, %s68
      %s70 = sphi 0, %s68
      %s71 = sphi 0, %s70
      %s85 = sphi 0, %s71
      %s91 = sphi 0, %s93
      %s94 = sphi 0, %s91
      %s95 = sphi 0, %s94
      %s111 = sphi 0, %s95
      %s115 = sphi 0, %s115
      %s117 = sphi 0, %s115
      %s118 = sphi 0, %s117
      %s132 = sphi 0, %s118
      %s136 = sphi 0, %s136
      %s138 = sphi 0, %s136
      %s139 = sphi 0, %s138
      %s153 = sphi 0, %s139
      %s157 = sphi 0, %s157
      %s159 = sphi 0, %s157
      %s160 = sphi 0, %s159
      %s174 = sphi 0, %s160
      %s180 = sphi 0, %s182
      %s183 = sphi 0, %s180
      %s184 = sphi 0, %s183
      %s200 = sphi 0, %s184
    $region4: #{tpu_custom_call.1} parent=1 // loop_header_branch
      %23 = sbr.rel (%p21) target = $region8
    $region5: #{tpu_custom_call.1} parent=1 // loop_body
      %s25 = ssub.s32 %s20, 1
      %s26 = ssub.s32 %s20, 2
      %s33 = sadd.s32 1, %s28
      %p34 = scmp.ge.s32.totalorder %s33, 1
      %s35 = scalar_select %p34, 0, %s33
      %s36 = sadd.s32 1, %s27
      %s37 = scalar_select %p34, %s36, %s27
      %p38 = scmp.ge.s32.totalorder %s37, 2
      %s39 = scalar_select %p38, 0, %s37
      %s40 = ssub.s32 %s27, %s39
      %s41 = ssub.s32 %s28, %s35
      %s42 = sor.u32 %s40, %s41
      %p43 = scmp.eq.s32.totalorder %s42, 0
      %s45 = sadd.s32 %s44, 1
      %s46 = scalar_select %p43, %s44, %s45
      %p49 = pneg %p43
      %p50 = scmp.eq.s32.totalorder %s20, 1
      %p51 = por %p49, %p50
      %p52 = scmp.ne.s32.totalorder %s44, %s47
      %p53 = scmp.eq.s32.totalorder %s20, 0
      %p54 = por %p52, %p53
      %p55 = scmp.ne.s32.totalorder %s44, %s47
      %p56 = scmp.eq.s32.totalorder %s25, 1
      %p57 = por %p55, %p56
      %p58 = scmp.ne.s32.totalorder %s47, %s48
      %p59 = scmp.eq.s32.totalorder %s25, 0
      %p60 = por %p58, %p59
      %p61 = scmp.ne.s32.totalorder %s47, %s48
      %p62 = scmp.eq.s32.totalorder %s26, 1
      %p63 = por %p61, %p62
      %p65 = scmp.ne.s32.totalorder %s48, %s64
      %p66 = scmp.eq.s32.totalorder %s26, 0
      %p67 = por %p65, %p66
      %s69 = sadd.s32 %s68, 1
      %p72 = scmp.eq.s32.totalorder %s20, 1
      %p73 = scmp.ne.s32.totalorder %s68, %s70
      %p74 = scmp.eq.s32.totalorder %s20, 0
      %p75 = por %p73, %p74
      %p76 = scmp.ne.s32.totalorder %s68, %s70
      %p77 = scmp.eq.s32.totalorder %s25, 1
      %p78 = por %p76, %p77
      %p79 = scmp.ne.s32.totalorder %s70, %s71
      %p80 = scmp.eq.s32.totalorder %s25, 0
      %p81 = por %p79, %p80
      %p82 = scmp.ne.s32.totalorder %s70, %s71
      %p83 = scmp.eq.s32.totalorder %s26, 1
      %p84 = por %p82, %p83
      %p86 = scmp.ne.s32.totalorder %s71, %s85
      %p87 = scmp.eq.s32.totalorder %s26, 0
      %p88 = por %p86, %p87
      %s89 = ssub.s32 %s28, %s35
      %p90 = scmp.eq.s32.totalorder %s89, 0
      %s92 = sadd.s32 %s91, 1
      %s93 = scalar_select %p90, %s91, %s92
      %p96 = pneg %p90
      %p97 = scmp.eq.s32.totalorder %s20, 1
      %p98 = por %p96, %p97
      %p99 = scmp.ne.s32.totalorder %s91, %s94
      %p100 = scmp.eq.s32.totalorder %s20, 0
      %p101 = por %p99, %p100
      %p102 = scmp.ne.s32.totalorder %s91, %s94
      %p103 = scmp.eq.s32.totalorder %s25, 1
      %p104 = por %p102, %p103
      %p105 = scmp.ne.s32.totalorder %s94, %s95
      %p106 = scmp.eq.s32.totalorder %s25, 0
      %p107 = por %p105, %p106
      %p108 = scmp.ne.s32.totalorder %s94, %s95
      %p109 = scmp.eq.s32.totalorder %s26, 1
      %p110 = por %p108, %p109
      %p112 = scmp.ne.s32.totalorder %s95, %s111
      %p113 = scmp.eq.s32.totalorder %s26, 0
      %p114 = por %p112, %p113
      %s116 = sadd.s32 %s115, 1
      %p119 = scmp.eq.s32.totalorder %s20, 1
      %p120 = scmp.ne.s32.totalorder %s115, %s117
      %p121 = scmp.eq.s32.totalorder %s20, 0
      %p122 = por %p120, %p121
      %p123 = scmp.ne.s32.totalorder %s115, %s117
      %p124 = scmp.eq.s32.totalorder %s25, 1
      %p125 = por %p123, %p124
      %p126 = scmp.ne.s32.totalorder %s117, %s118
      %p127 = scmp.eq.s32.totalorder %s25, 0
      %p128 = por %p126, %p127
      %p129 = scmp.ne.s32.totalorder %s117, %s118
      %p130 = scmp.eq.s32.totalorder %s26, 1
      %p131 = por %p129, %p130
      %p133 = scmp.ne.s32.totalorder %s118, %s132
      %p134 = scmp.eq.s32.totalorder %s26, 0
      %p135 = por %p133, %p134
      %s137 = sadd.s32 %s136, 1
      %p140 = scmp.eq.s32.totalorder %s20, 1
      %p141 = scmp.ne.s32.totalorder %s136, %s138
      %p142 = scmp.eq.s32.totalorder %s20, 0
      %p143 = por %p141, %p142
      %p144 = scmp.ne.s32.totalorder %s136, %s138
      %p145 = scmp.eq.s32.totalorder %s25, 1
      %p146 = por %p144, %p145
      %p147 = scmp.ne.s32.totalorder %s138, %s139
      %p148 = scmp.eq.s32.totalorder %s25, 0
      %p149 = por %p147, %p148
      %p150 = scmp.ne.s32.totalorder %s138, %s139
      %p151 = scmp.eq.s32.totalorder %s26, 1
      %p152 = por %p150, %p151
      %p154 = scmp.ne.s32.totalorder %s139, %s153
      %p155 = scmp.eq.s32.totalorder %s26, 0
      %p156 = por %p154, %p155
      %s158 = sadd.s32 %s157, 1
      %p161 = scmp.eq.s32.totalorder %s20, 1
      %p162 = scmp.ne.s32.totalorder %s157, %s159
      %p163 = scmp.eq.s32.totalorder %s20, 0
      %p164 = por %p162, %p163
      %p165 = scmp.ne.s32.totalorder %s157, %s159
      %p166 = scmp.eq.s32.totalorder %s25, 1
      %p167 = por %p165, %p166
      %p168 = scmp.ne.s32.totalorder %s159, %s160
      %p169 = scmp.eq.s32.totalorder %s25, 0
      %p170 = por %p168, %p169
      %p171 = scmp.ne.s32.totalorder %s159, %s160
      %p172 = scmp.eq.s32.totalorder %s26, 1
      %p173 = por %p171, %p172
      %p175 = scmp.ne.s32.totalorder %s160, %s174
      %p176 = scmp.eq.s32.totalorder %s26, 0
      %p177 = por %p175, %p176
      %s178 = ssub.s32 %s27, %s39
      %p179 = scmp.eq.s32.totalorder %s178, 0
      %s181 = sadd.s32 %s180, 1
      %s182 = scalar_select %p179, %s180, %s181
      %p185 = pneg %p179
      %p186 = scmp.eq.s32.totalorder %s20, 1
      %p187 = por %p185, %p186
      %p188 = scmp.ne.s32.totalorder %s180, %s183
      %p189 = scmp.eq.s32.totalorder %s20, 0
      %p190 = por %p188, %p189
      %p191 = scmp.ne.s32.totalorder %s180, %s183
      %p192 = scmp.eq.s32.totalorder %s25, 1
      %p193 = por %p191, %p192
      %p194 = scmp.ne.s32.totalorder %s183, %s184
      %p195 = scmp.eq.s32.totalorder %s25, 0
      %p196 = por %p194, %p195
      %p197 = scmp.ne.s32.totalorder %s183, %s184
      %p198 = scmp.eq.s32.totalorder %s26, 1
      %p199 = por %p197, %p198
      %p201 = scmp.ne.s32.totalorder %s184, %s200
      %p202 = scmp.eq.s32.totalorder %s26, 0
      %p203 = por %p201, %p202
      %p204 = scmp.le.s32.totalorder 1, %s20
      %p205 = scmp.lt.s32.totalorder %s20, 3
      %p206 = pnand %p204, %p205
      %p207 = pneg %p206
      // Predicated region
      $region9: #{tpu_custom_call.1} parent=5 // pred_check
        _
      $region10: #{tpu_custom_call.1} parent=5 // pred_check_branch
        %209 = sbr.rel (%p206) target = $region12
      $region11: #{tpu_custom_call.1} parent=5 // pred_region
        %s210 = ssub.s32 %s20, 1
        // Predicated region
        $region13: #{tpu_custom_call.1} parent=11 // pred_check
          %p211 = pneg %p81
        $region14: #{tpu_custom_call.1} parent=11 // pred_check_branch
          %213 = sbr.rel (%p211) target = $region16
        $region15: #{tpu_custom_call.1} parent=11 // pred_region
          %s215 = ssub.s32 1024, 1024
          %216 = vsyncadd [#allocation7], %s215
          %s217 = sshll.u32 [#allocation6], 4
          %s218 = int_to_ptr.vmem [resolvable:$true] %s217
          %223 = dma.hbm_to_vmem [thread:$0]  %s1, 1024, %s218, [#allocation7], 64, 64, 4
        $region16: #{tpu_custom_call.1} parent=11 // pred_fallthru
          _
        // Predicated region
        $region17: #{tpu_custom_call.1} parent=11 // pred_check
          %p224 = pneg %p107
        $region18: #{tpu_custom_call.1} parent=11 // pred_check_branch
          %226 = sbr.rel (%p224) target = $region20
        $region19: #{tpu_custom_call.1} parent=11 // pred_region
          %s227 = smul.u32 2, %s30
          %s229 = ssub.s32 256, 256
          %230 = vsyncadd [#allocation7], %s229
          %s231 = smul.addr %s227, 128
          %s232 = scalar_lea.hbm %s2, %s231
          %s233 = sshll.u32 [#allocation8], 4
          %s234 = int_to_ptr.vmem [resolvable:$true] %s233
          %239 = dma.hbm_to_vmem [thread:$0]  %s232, 256, %s234, [#allocation7], 128, 128, 8
        $region20: #{tpu_custom_call.1} parent=11 // pred_fallthru
          _
        // Predicated region
        $region21: #{tpu_custom_call.1} parent=11 // pred_check
          %p240 = pneg %p128
        $region22: #{tpu_custom_call.1} parent=11 // pred_check_branch
          %242 = sbr.rel (%p240) target = $region24
        $region23: #{tpu_custom_call.1} parent=11 // pred_region
          _
        $region24: #{tpu_custom_call.1} parent=11 // pred_fallthru
          _
        // Predicated region
        $region25: #{tpu_custom_call.1} parent=11 // pred_check
          %p243 = pneg %p149
        $region26: #{tpu_custom_call.1} parent=11 // pred_check_branch
          %245 = sbr.rel (%p243) target = $region28
        $region27: #{tpu_custom_call.1} parent=11 // pred_region
          %s247 = ssub.s32 1024, 1024
          %248 = vsyncadd [#allocation10], %s247
          %s249 = sshll.u32 [#allocation9], 4
          %s250 = int_to_ptr.vmem [resolvable:$true] %s249
          %255 = dma.hbm_to_vmem [thread:$0]  %s4, 1024, %s250, [#allocation10], 64, 64, 4
        $region28: #{tpu_custom_call.1} parent=11 // pred_fallthru
          _
        // Predicated region
        $region29: #{tpu_custom_call.1} parent=11 // pred_check
          %p256 = pneg %p170
        $region30: #{tpu_custom_call.1} parent=11 // pred_check_branch
          %258 = sbr.rel (%p256) target = $region32
        $region31: #{tpu_custom_call.1} parent=11 // pred_region
          _
        $region32: #{tpu_custom_call.1} parent=11 // pred_fallthru
          _
      $region12: #{tpu_custom_call.1} parent=5 // pred_fallthru
        _
      %p259 = scmp.lt.s32.totalorder %s20, 2
      // Predicated region
      $region33: #{tpu_custom_call.1} parent=5 // pred_check
        %p260 = pneg %p259
      $region34: #{tpu_custom_call.1} parent=5 // pred_check_branch
        %262 = sbr.rel (%p260) target = $region36
      $region35: #{tpu_custom_call.1} parent=5 // pred_region
        // Predicated region
        $region37: #{tpu_custom_call.1} parent=35 // pred_check
          %p263 = pneg %p54
        $region38: #{tpu_custom_call.1} parent=35 // pred_check_branch
          %265 = sbr.rel (%p263) target = $region40
        $region39: #{tpu_custom_call.1} parent=35 // pred_region
          %s266 = sand.u32 %s44, 1
          %s267 = scalar_lea.sflag [#allocation4], %s266
          %s268 = sand.u32 %s44, 1
          %s269 = smul.addr %s268, 64
          %s270 = scalar_lea.vmem [#allocation3], %s269
          %s271 = smul.u32 8, %s27
          %s272 = smul.u32 2, %s28
          %s274 = ssub.s32 1024, 1024
          %275 = vsyncadd %s267, %s274
          %s276 = smul.addr %s271, 2
          %s277 = sadd.s32 %s272, %s276
          %s278 = smul.addr %s277, 64
          %s279 = scalar_lea.hbm %s0, %s278
          %s280 = sshll.u32 %s270, 4
          %s281 = int_to_ptr.vmem [resolvable:$true] %s280
          %286 = dma.hbm_to_vmem [thread:$0]  %s279, 1024, %s281, %s267, 64, 64, 4
        $region40: #{tpu_custom_call.1} parent=35 // pred_fallthru
          _
      $region36: #{tpu_custom_call.1} parent=5 // pred_fallthru
        _
      %p287 = scmp.le.s32.totalorder 1, %s20
      %p288 = scmp.lt.s32.totalorder %s20, 3
      %p289 = pnand %p287, %p288
      %p290 = pneg %p289
      // Predicated region
      $region41: #{tpu_custom_call.1} parent=5 // pred_check
        _
      $region42: #{tpu_custom_call.1} parent=5 // pred_check_branch
        %292 = sbr.rel (%p289) target = $region44
      $region43: #{tpu_custom_call.1} parent=5 // pred_region
        %s293 = ssub.s32 %s20, 1
        %s294 = sand.u32 %s47, 1
        %s295 = scalar_lea.sflag [#allocation4], %s294
        %s296 = sand.u32 %s47, 1
        %s297 = smul.addr %s296, 64
        %s298 = scalar_lea.vmem [#allocation3], %s297
        // Predicated region
        $region45: #{tpu_custom_call.1} parent=43 // pred_check
          %p299 = pneg %p60
        $region46: #{tpu_custom_call.1} parent=43 // pred_check_branch
          %301 = sbr.rel (%p299) target = $region48
        $region47: #{tpu_custom_call.1} parent=43 // pred_region
          %302 = dma.done %s295, 1024
        $region48: #{tpu_custom_call.1} parent=43 // pred_fallthru
          _
        // Predicated region
        $region49: #{tpu_custom_call.1} parent=43 // pred_check
          %p303 = pneg %p81
        $region50: #{tpu_custom_call.1} parent=43 // pred_check_branch
          %305 = sbr.rel (%p303) target = $region52
        $region51: #{tpu_custom_call.1} parent=43 // pred_region
          %306 = dma.done [#allocation7], 1024
        $region52: #{tpu_custom_call.1} parent=43 // pred_fallthru
          _
        // Predicated region
        $region53: #{tpu_custom_call.1} parent=43 // pred_check
          %p307 = pneg %p107
        $region54: #{tpu_custom_call.1} parent=43 // pred_check_branch
          %309 = sbr.rel (%p307) target = $region56
        $region55: #{tpu_custom_call.1} parent=43 // pred_region
          %310 = dma.done [#allocation7], 256
        $region56: #{tpu_custom_call.1} parent=43 // pred_fallthru
          _
        // Predicated region
        $region57: #{tpu_custom_call.1} parent=43 // pred_check
          %p311 = pneg %p149
        $region58: #{tpu_custom_call.1} parent=43 // pred_check_branch
          %313 = sbr.rel (%p311) target = $region60
        $region59: #{tpu_custom_call.1} parent=43 // pred_region
          %314 = dma.done [#allocation10], 1024
        $region60: #{tpu_custom_call.1} parent=43 // pred_fallthru
          _
        %s315 = sand.u32 %s47, 1
        %s316 = scalar_lea.sflag [#allocation4], %s315
        %s317 = sand.u32 %s47, 1
        %s318 = smul.addr %s317, 64
        %s319 = scalar_lea.vmem [#allocation3], %s318
        %p320 = pneg %p60
        %p321 = pneg %p57
        %p322 = pneg %p81
        %p323 = pneg %p78
        %p324 = pneg %p107
        %p325 = pneg %p104
        %p326 = pneg %p128
        %p327 = pneg %p125
        %p328 = pneg %p149
        %p329 = pneg %p146
        %p330 = pneg %p170
        %p331 = pneg %p167
        %p332 = pneg %p196
        %p333 = pneg %p193
        %s334 = sand.u32 %s183, 1
        %s335 = scalar_lea.sflag [#allocation5], %s334
        %s336 = sand.u32 %s183, 1
        %s337 = smul.addr %s336, 8
        %s338 = scalar_lea.vmem [#allocation11], %s337
        %s339 = smul.u32 8, %s29
        %s340 = smul.u32 2, %s30
        %s341 = smul.u32 2, %s30
        %p343 = scmp.eq.s32.totalorder %s30, 0
        // Predicated region
        $region61: #{tpu_custom_call.1} parent=43 // pred_check
          %p344 = pneg %p343
        $region62: #{tpu_custom_call.1} parent=43 // pred_check_branch
          %346 = sbr.rel (%p344) target = $region64
        $region63: #{tpu_custom_call.1} parent=43 // pred_region
          %347 = vst [vmem:[#allocation2] sm:$0xff] -3e+38
        $region64: #{tpu_custom_call.1} parent=43 // pred_fallthru
          _
        %v348 = vld [vmem:[%s298] sm:$0xf]
        %v349 = vld [vmem:[%s298 + $0x4] sm:$0xf]
        %v350 = vld [vmem:[%s298 + $0x8] sm:$0xf]
        %v351 = vld [vmem:[%s298 + $0xc] sm:$0xf]
        %v352 = vld [vmem:[%s298 + $0x10] sm:$0xf]
        %v353 = vld [vmem:[%s298 + $0x14] sm:$0xf]
        %v354 = vld [vmem:[%s298 + $0x18] sm:$0xf]
        %v355 = vld [vmem:[%s298 + $0x1c] sm:$0xf]
        %v356 = vld [vmem:[%s298 + $0x20] sm:$0xf]
        %v357 = vld [vmem:[%s298 + $0x24] sm:$0xf]
        %v358 = vld [vmem:[%s298 + $0x28] sm:$0xf]
        %v359 = vld [vmem:[%s298 + $0x2c] sm:$0xf]
        %v360 = vld [vmem:[%s298 + $0x30] sm:$0xf]
        %v361 = vld [vmem:[%s298 + $0x34] sm:$0xf]
        %v362 = vld [vmem:[%s298 + $0x38] sm:$0xf]
        %v363 = vld [vmem:[%s298 + $0x3c] sm:$0xf]
        %v364 = vld [vmem:[#allocation6] sm:$0xf]
        %v365 = vld [vmem:[#allocation6 + $0x4] sm:$0xf]
        %v366 = vld [vmem:[#allocation6 + $0x8] sm:$0xf]
        %v367 = vld [vmem:[#allocation6 + $0xc] sm:$0xf]
        %v368 = vld [vmem:[#allocation6 + $0x10] sm:$0xf]
        %v369 = vld [vmem:[#allocation6 + $0x14] sm:$0xf]
        %v370 = vld [vmem:[#allocation6 + $0x18] sm:$0xf]
        %v371 = vld [vmem:[#allocation6 + $0x1c] sm:$0xf]
        %v372 = vld [vmem:[#allocation6 + $0x20] sm:$0xf]
        %v373 = vld [vmem:[#allocation6 + $0x24] sm:$0xf]
        %v374 = vld [vmem:[#allocation6 + $0x28] sm:$0xf]
        %v375 = vld [vmem:[#allocation6 + $0x2c] sm:$0xf]
        %v376 = vld [vmem:[#allocation6 + $0x30] sm:$0xf]
        %v377 = vld [vmem:[#allocation6 + $0x34] sm:$0xf]
        %v378 = vld [vmem:[#allocation6 + $0x38] sm:$0xf]
        %v379 = vld [vmem:[#allocation6 + $0x3c] sm:$0xf]
        %v396 = vunpack.c.l.b16 %v348
        %v397 = vunpack.c.l.b16 %v349
        %v398 = vunpack.c.l.b16 %v350
        %v399 = vunpack.c.l.b16 %v351
        %v400 = vunpack.c.l.b16 %v352
        %v401 = vunpack.c.l.b16 %v353
        %v402 = vunpack.c.l.b16 %v354
        %v403 = vunpack.c.l.b16 %v355
        %v404 = vunpack.c.l.b16 %v356
        %v405 = vunpack.c.l.b16 %v357
        %v406 = vunpack.c.l.b16 %v358
        %v407 = vunpack.c.l.b16 %v359
        %v408 = vunpack.c.l.b16 %v360
        %v409 = vunpack.c.l.b16 %v361
        %v410 = vunpack.c.l.b16 %v362
        %v411 = vunpack.c.l.b16 %v363
        %v412 = vpack.c.b16 %v397, %v396
        %v413 = vpack.c.b16 %v399, %v398
        %v414 = vpack.c.b16 %v401, %v400
        %v415 = vpack.c.b16 %v403, %v402
        %v416 = vpack.c.b16 %v405, %v404
        %v417 = vpack.c.b16 %v407, %v406
        %v418 = vpack.c.b16 %v409, %v408
        %v419 = vpack.c.b16 %v411, %v410
        %v444 = vunpack.c.l.b16 %v364
        %v445 = vunpack.c.l.b16 %v365
        %v446 = vunpack.c.l.b16 %v366
        %v447 = vunpack.c.l.b16 %v367
        %v448 = vunpack.c.l.b16 %v368
        %v449 = vunpack.c.l.b16 %v369
        %v450 = vunpack.c.l.b16 %v370
        %v451 = vunpack.c.l.b16 %v371
        %v452 = vunpack.c.l.b16 %v372
        %v453 = vunpack.c.l.b16 %v373
        %v454 = vunpack.c.l.b16 %v374
        %v455 = vunpack.c.l.b16 %v375
        %v456 = vunpack.c.l.b16 %v376
        %v457 = vunpack.c.l.b16 %v377
        %v458 = vunpack.c.l.b16 %v378
        %v459 = vunpack.c.l.b16 %v379
        %v460 = vpack.c.b16 %v445, %v444
        %v461 = vpack.c.b16 %v447, %v446
        %v462 = vpack.c.b16 %v449, %v448
        %v463 = vpack.c.b16 %v451, %v450
        %v464 = vpack.c.b16 %v453, %v452
        %v465 = vpack.c.b16 %v455, %v454
        %v466 = vpack.c.b16 %v457, %v456
        %v467 = vpack.c.b16 %v459, %v458
        %476 = vmatprep.subr.bf16.mxu0 0
        %477 = vmatpush1.bf16.msra.mxu0 %v460
        %478 = vmatprep.subr.bf16.mxu0 0
        %479 = vmatpush1.bf16.msra.mxu0 %v461
        %480 = vmatprep.subr.bf16.mxu0 0
        %481 = vmatpush1.bf16.msra.mxu0 %v462
        %482 = vmatprep.subr.bf16.mxu0 0
        %483 = vmatpush1.bf16.msra.mxu0 %v463
        %484 = vmatprep.subr.bf16.mxu0 0
        %485 = vmatpush1.bf16.msra.mxu0 %v464
        %486 = vmatprep.subr.bf16.mxu0 0
        %487 = vmatpush1.bf16.msra.mxu0 %v465
        %488 = vmatprep.subr.bf16.mxu0 0
        %489 = vmatpush1.bf16.msra.mxu0 %v466
        %490 = vmatprep.subr.bf16.mxu0 0
        %491 = vmatpush1.bf16.msra.mxu0 %v467
        %492 = vmatprep.subr.bf16.mxu0 0
        %493 = vmatpush1.bf16.msra.mxu0 0
        %494 = vmatprep.subr.bf16.mxu0 0
        %495 = vmatpush1.bf16.msra.mxu0 0
        %496 = vmatprep.subr.bf16.mxu0 0
        %497 = vmatpush1.bf16.msra.mxu0 0
        %498 = vmatprep.subr.bf16.mxu0 0
        %499 = vmatpush1.bf16.msra.mxu0 0
        %500 = vmatprep.subr.bf16.mxu0 0
        %501 = vmatpush1.bf16.msra.mxu0 0
        %502 = vmatprep.subr.bf16.mxu0 0
        %503 = vmatpush1.bf16.msra.mxu0 0
        %504 = vmatprep.subr.bf16.mxu0 0
        %505 = vmatpush1.bf16.msra.mxu0 0
        %506 = vmatprep.subr.bf16.mxu0 0
        %507 = vmatpush1.bf16.msra.mxu0 0
        %508 = vmatprep.mubr.bf16.mxu0 0
        %509 = vmatmul.mubr.bf16.gmra.mrb[0].mxu0 %v412
        %v510 = vpop.f32.mrb[0].mxu0
        %v511 = vadd.f32 0.0, %v510
        %v512 = vpop.f32.mrb[0].mxu0
        %v513 = vpop.f32.mrb[0].mxu0
        %v514 = vadd.f32 0.0, %v513
        %v515 = vpop.f32.mrb[0].mxu0
        %516 = vmatprep.mubr.bf16.mxu0 0
        %517 = vmatmul.mubr.bf16.gmra.mrb[0].mxu0 %v413
        %v518 = vpop.f32.mrb[0].mxu0
        %v519 = vadd.f32 0.0, %v518
        %v520 = vpop.f32.mrb[0].mxu0
        %v521 = vpop.f32.mrb[0].mxu0
        %v522 = vadd.f32 0.0, %v521
        %v523 = vpop.f32.mrb[0].mxu0
        %524 = vmatprep.mubr.bf16.mxu0 0
        %525 = vmatmul.mubr.bf16.gmra.mrb[0].mxu0 %v414
        %v526 = vpop.f32.mrb[0].mxu0
        %v527 = vadd.f32 0.0, %v526
        %v528 = vpop.f32.mrb[0].mxu0
        %v529 = vpop.f32.mrb[0].mxu0
        %v530 = vadd.f32 0.0, %v529
        %v531 = vpop.f32.mrb[0].mxu0
        %532 = vmatprep.mubr.bf16.mxu0 0
        %533 = vmatmul.mubr.bf16.gmra.mrb[0].mxu0 %v415
        %v534 = vpop.f32.mrb[0].mxu0
        %v535 = vadd.f32 0.0, %v534
        %v536 = vpop.f32.mrb[0].mxu0
        %v537 = vpop.f32.mrb[0].mxu0
        %v538 = vadd.f32 0.0, %v537
        %v539 = vpop.f32.mrb[0].mxu0
        %540 = vmatprep.mubr.bf16.mxu0 0
        %541 = vmatmul.mubr.bf16.gmra.mrb[0].mxu0 %v416
        %v542 = vpop.f32.mrb[0].mxu0
        %v543 = vadd.f32 0.0, %v542
        %v544 = vpop.f32.mrb[0].mxu0
        %v545 = vpop.f32.mrb[0].mxu0
        %v546 = vadd.f32 0.0, %v545
        %v547 = vpop.f32.mrb[0].mxu0
        %548 = vmatprep.mubr.bf16.mxu0 0
        %549 = vmatmul.mubr.bf16.gmra.mrb[0].mxu0 %v417
        %v550 = vpop.f32.mrb[0].mxu0
        %v551 = vadd.f32 0.0, %v550
        %v552 = vpop.f32.mrb[0].mxu0
        %v553 = vpop.f32.mrb[0].mxu0
        %v554 = vadd.f32 0.0, %v553
        %v555 = vpop.f32.mrb[0].mxu0
        %556 = vmatprep.mubr.bf16.mxu0 0
        %557 = vmatmul.mubr.bf16.gmra.mrb[0].mxu0 %v418
        %v558 = vpop.f32.mrb[0].mxu0
        %v559 = vadd.f32 0.0, %v558
        %v560 = vpop.f32.mrb[0].mxu0
        %v561 = vpop.f32.mrb[0].mxu0
        %v562 = vadd.f32 0.0, %v561
        %v563 = vpop.f32.mrb[0].mxu0
        %564 = vmatprep.mubr.bf16.mxu0 0
        %565 = vmatmul.mubr.bf16.gmra.mrb[0].mxu0 %v419
        %v566 = vpop.f32.mrb[0].mxu0
        %v567 = vadd.f32 0.0, %v566
        %v568 = vpop.f32.mrb[0].mxu0
        %v569 = vpop.f32.mrb[0].mxu0
        %v570 = vadd.f32 0.0, %v569
        %v571 = vpop.f32.mrb[0].mxu0
        %572 = vdwg.mxu0
        %p573 = scmp.lt.s32.totalorder %s30, 0
        // Predicated region
        $region65: #{tpu_custom_call.1} parent=43 // pred_check
          %p574 = pneg %p573
        $region66: #{tpu_custom_call.1} parent=43 // pred_check_branch
          %576 = sbr.rel (%p574) target = $region68
        $region67: #{tpu_custom_call.1} parent=43 // pred_region
          %v577 = vld [vmem:[#allocation2] sm:$0xff]
          %v578 = vmax.f32 %v511, %v514
          %v579 = vrot.slane %v578, 4
          %v580 = vmax.f32 %v578, %v579
          %v581 = vrot.slane %v580, 2
          %v582 = vmax.f32 %v580, %v581
          %v583 = vrot.slane %v582, 1
          %v584 = vmax.f32 %v582, %v583
          %v585 = vmax.f32 %v519, %v522
          %v586 = vrot.slane %v585, 4
          %v587 = vmax.f32 %v585, %v586
          %v588 = vrot.slane %v587, 2
          %v589 = vmax.f32 %v587, %v588
          %v590 = vrot.slane %v589, 1
          %v591 = vmax.f32 %v589, %v590
          %v592 = vmax.f32 %v527, %v530
          %v593 = vrot.slane %v592, 4
          %v594 = vmax.f32 %v592, %v593
          %v595 = vrot.slane %v594, 2
          %v596 = vmax.f32 %v594, %v595
          %v597 = vrot.slane %v596, 1
          %v598 = vmax.f32 %v596, %v597
          %v599 = vmax.f32 %v535, %v538
          %v600 = vrot.slane %v599, 4
          %v601 = vmax.f32 %v599, %v600
          %v602 = vrot.slane %v601, 2
          %v603 = vmax.f32 %v601, %v602
          %v604 = vrot.slane %v603, 1
          %v605 = vmax.f32 %v603, %v604
          %v606 = vmax.f32 %v543, %v546
          %v607 = vrot.slane %v606, 4
          %v608 = vmax.f32 %v606, %v607
          %v609 = vrot.slane %v608, 2
          %v610 = vmax.f32 %v608, %v609
          %v611 = vrot.slane %v610, 1
          %v612 = vmax.f32 %v610, %v611
          %v613 = vmax.f32 %v551, %v554
          %v614 = vrot.slane %v613, 4
          %v615 = vmax.f32 %v613, %v614
          %v616 = vrot.slane %v615, 2
          %v617 = vmax.f32 %v615, %v616
          %v618 = vrot.slane %v617, 1
          %v619 = vmax.f32 %v617, %v618
          %v620 = vmax.f32 %v559, %v562
          %v621 = vrot.slane %v620, 4
          %v622 = vmax.f32 %v620, %v621
          %v623 = vrot.slane %v622, 2
          %v624 = vmax.f32 %v622, %v623
          %v625 = vrot.slane %v624, 1
          %v626 = vmax.f32 %v624, %v625
          %v627 = vmax.f32 %v567, %v570
          %v628 = vrot.slane %v627, 4
          %v629 = vmax.f32 %v627, %v628
          %v630 = vrot.slane %v629, 2
          %v631 = vmax.f32 %v629, %v630
          %v632 = vrot.slane %v631, 1
          %v633 = vmax.f32 %v631, %v632
          %vm642 = vcmask 1041409
          %v643 = vsel %vm642, %v591, %v584
          %vm644 = vcmask 1042434
          %v645 = vsel %vm644, %v598, %v643
          %vm646 = vcmask 1043459
          %v647 = vsel %vm646, %v605, %v645
          %vm648 = vcmask 1044484
          %v649 = vsel %vm648, %v612, %v647
          %vm650 = vcmask 1045509
          %v651 = vsel %vm650, %v619, %v649
          %vm652 = vcmask 1046534
          %v653 = vsel %vm652, %v626, %v651
          %vm654 = vcmask 1047559
          %v655 = vsel %vm654, %v633, %v653
          %v657 = vmax.f32 %v577, %v655
          %658 = vst [vmem:[#allocation2] sm:$0xff] %v657
        $region68: #{tpu_custom_call.1} parent=43 // pred_fallthru
          _
        %p659 = scmp.ge.s32.totalorder %s30, 0
        // Predicated region
        $region69: #{tpu_custom_call.1} parent=43 // pred_check
          %p660 = pneg %p659
        $region70: #{tpu_custom_call.1} parent=43 // pred_check_branch
          %662 = sbr.rel (%p660) target = $region72
        $region71: #{tpu_custom_call.1} parent=43 // pred_region
          %v663 = vld [vmem:[#allocation8] sm:$0xff]
          %v664 = vld [vmem:[#allocation8 + $0x8] sm:$0xff]
          %v665 = vadd.f32 %v511, %v663
          %v666 = vadd.f32 %v514, %v664
          %v667 = vadd.f32 %v519, %v663
          %v668 = vadd.f32 %v522, %v664
          %v669 = vadd.f32 %v527, %v663
          %v670 = vadd.f32 %v530, %v664
          %v671 = vadd.f32 %v535, %v663
          %v672 = vadd.f32 %v538, %v664
          %v673 = vadd.f32 %v543, %v663
          %v674 = vadd.f32 %v546, %v664
          %v675 = vadd.f32 %v551, %v663
          %v676 = vadd.f32 %v554, %v664
          %v677 = vadd.f32 %v559, %v663
          %v678 = vadd.f32 %v562, %v664
          %v679 = vadd.f32 %v567, %v663
          %v680 = vadd.f32 %v570, %v664
          %v681 = vld [vmem:[#allocation2] sm:$0xff]
          %v682 = vmax.f32 %v665, %v666
          %v683 = vrot.slane %v682, 4
          %v684 = vmax.f32 %v682, %v683
          %v685 = vrot.slane %v684, 2
          %v686 = vmax.f32 %v684, %v685
          %v687 = vrot.slane %v686, 1
          %v688 = vmax.f32 %v686, %v687
          %v689 = vmax.f32 %v667, %v668
          %v690 = vrot.slane %v689, 4
          %v691 = vmax.f32 %v689, %v690
          %v692 = vrot.slane %v691, 2
          %v693 = vmax.f32 %v691, %v692
          %v694 = vrot.slane %v693, 1
          %v695 = vmax.f32 %v693, %v694
          %v696 = vmax.f32 %v669, %v670
          %v697 = vrot.slane %v696, 4
          %v698 = vmax.f32 %v696, %v697
          %v699 = vrot.slane %v698, 2
          %v700 = vmax.f32 %v698, %v699
          %v701 = vrot.slane %v700, 1
          %v702 = vmax.f32 %v700, %v701
          %v703 = vmax.f32 %v671, %v672
          %v704 = vrot.slane %v703, 4
          %v705 = vmax.f32 %v703, %v704
          %v706 = vrot.slane %v705, 2
          %v707 = vmax.f32 %v705, %v706
          %v708 = vrot.slane %v707, 1
          %v709 = vmax.f32 %v707, %v708
          %v710 = vmax.f32 %v673, %v674
          %v711 = vrot.slane %v710, 4
          %v712 = vmax.f32 %v710, %v711
          %v713 = vrot.slane %v712, 2
          %v714 = vmax.f32 %v712, %v713
          %v715 = vrot.slane %v714, 1
          %v716 = vmax.f32 %v714, %v715
          %v717 = vmax.f32 %v675, %v676
          %v718 = vrot.slane %v717, 4
          %v719 = vmax.f32 %v717, %v718
          %v720 = vrot.slane %v719, 2
          %v721 = vmax.f32 %v719, %v720
          %v722 = vrot.slane %v721, 1
          %v723 = vmax.f32 %v721, %v722
          %v724 = vmax.f32 %v677, %v678
          %v725 = vrot.slane %v724, 4
          %v726 = vmax.f32 %v724, %v725
          %v727 = vrot.slane %v726, 2
          %v728 = vmax.f32 %v726, %v727
          %v729 = vrot.slane %v728, 1
          %v730 = vmax.f32 %v728, %v729
          %v731 = vmax.f32 %v679, %v680
          %v732 = vrot.slane %v731, 4
          %v733 = vmax.f32 %v731, %v732
          %v734 = vrot.slane %v733, 2
          %v735 = vmax.f32 %v733, %v734
          %v736 = vrot.slane %v735, 1
          %v737 = vmax.f32 %v735, %v736
          %vm746 = vcmask 1041409
          %v747 = vsel %vm746, %v695, %v688
          %vm748 = vcmask 1042434
          %v749 = vsel %vm748, %v702, %v747
          %vm750 = vcmask 1043459
          %v751 = vsel %vm750, %v709, %v749
          %vm752 = vcmask 1044484
          %v753 = vsel %vm752, %v716, %v751
          %vm754 = vcmask 1045509
          %v755 = vsel %vm754, %v723, %v753
          %vm756 = vcmask 1046534
          %v757 = vsel %vm756, %v730, %v755
          %vm758 = vcmask 1047559
          %v759 = vsel %vm758, %v737, %v757
          %v761 = vmax.f32 %v681, %v759
          %762 = vst [vmem:[#allocation2] sm:$0xff] %v761
        $region72: #{tpu_custom_call.1} parent=43 // pred_fallthru
          _
        // Predicated region
        $region73: #{tpu_custom_call.1} parent=43 // pred_check
          %p763 = pneg %p343
        $region74: #{tpu_custom_call.1} parent=43 // pred_check_branch
          %765 = sbr.rel (%p763) target = $region76
        $region75: #{tpu_custom_call.1} parent=43 // pred_region
          %v766 = vld [vmem:[#allocation2] sm:$0xff]
          %v767 = vld [vmem:[%s3] sm:$0x1]
          %v769 = vlaneseq
          %v770 = vshrl.u32 %v769, 7
          %v771 = vsub.s32 0, %v770
          %v772 = vrot.slane %v767, %v771
          %v774 = vadd.f32 %v766, %v772
          %v775 = vmax.f32 %v774, 0.0
          %v776 = vpack.c.bf16 %v775, %v775
          %v777 = vld [vmem:[#allocation9] sm:$0xf]
          %v778 = vld [vmem:[#allocation9 + $0x4] sm:$0xf]
          %v779 = vld [vmem:[#allocation9 + $0x8] sm:$0xf]
          %v780 = vld [vmem:[#allocation9 + $0xc] sm:$0xf]
          %v781 = vld [vmem:[#allocation9 + $0x10] sm:$0xf]
          %v782 = vld [vmem:[#allocation9 + $0x14] sm:$0xf]
          %v783 = vld [vmem:[#allocation9 + $0x18] sm:$0xf]
          %v784 = vld [vmem:[#allocation9 + $0x1c] sm:$0xf]
          %v785 = vld [vmem:[#allocation9 + $0x20] sm:$0xf]
          %v786 = vld [vmem:[#allocation9 + $0x24] sm:$0xf]
          %v787 = vld [vmem:[#allocation9 + $0x28] sm:$0xf]
          %v788 = vld [vmem:[#allocation9 + $0x2c] sm:$0xf]
          %v789 = vld [vmem:[#allocation9 + $0x30] sm:$0xf]
          %v790 = vld [vmem:[#allocation9 + $0x34] sm:$0xf]
          %v791 = vld [vmem:[#allocation9 + $0x38] sm:$0xf]
          %v792 = vld [vmem:[#allocation9 + $0x3c] sm:$0xf]
          %v793 = vld [vmem:[%s5] sm:$0x1]
          %v795 = vlaneseq
          %v796 = vshrl.u32 %v795, 7
          %v797 = vsub.s32 0, %v796
          %v798 = vrot.slane %v793, %v797
          %v816 = vunpack.c.l.b16 %v777
          %v817 = vunpack.c.l.b16 %v778
          %v818 = vunpack.c.l.b16 %v779
          %v819 = vunpack.c.l.b16 %v780
          %v820 = vunpack.c.l.b16 %v781
          %v821 = vunpack.c.l.b16 %v782
          %v822 = vunpack.c.l.b16 %v783
          %v823 = vunpack.c.l.b16 %v784
          %v824 = vunpack.c.l.b16 %v785
          %v825 = vunpack.c.l.b16 %v786
          %v826 = vunpack.c.l.b16 %v787
          %v827 = vunpack.c.l.b16 %v788
          %v828 = vunpack.c.l.b16 %v789
          %v829 = vunpack.c.l.b16 %v790
          %v830 = vunpack.c.l.b16 %v791
          %v831 = vunpack.c.l.b16 %v792
          %v832 = vpack.c.b16 %v817, %v816
          %v833 = vpack.c.b16 %v819, %v818
          %v834 = vpack.c.b16 %v821, %v820
          %v835 = vpack.c.b16 %v823, %v822
          %v836 = vpack.c.b16 %v825, %v824
          %v837 = vpack.c.b16 %v827, %v826
          %v838 = vpack.c.b16 %v829, %v828
          %v839 = vpack.c.b16 %v831, %v830
          %848 = vmatprep.subr.bf16.mxu0 0
          %849 = vmatpush1.bf16.msra.mxu0 %v832
          %850 = vmatprep.subr.bf16.mxu0 0
          %851 = vmatpush1.bf16.msra.mxu0 %v833
          %852 = vmatprep.subr.bf16.mxu0 0
          %853 = vmatpush1.bf16.msra.mxu0 %v834
          %854 = vmatprep.subr.bf16.mxu0 0
          %855 = vmatpush1.bf16.msra.mxu0 %v835
          %856 = vmatprep.subr.bf16.mxu0 0
          %857 = vmatpush1.bf16.msra.mxu0 %v836
          %858 = vmatprep.subr.bf16.mxu0 0
          %859 = vmatpush1.bf16.msra.mxu0 %v837
          %860 = vmatprep.subr.bf16.mxu0 0
          %861 = vmatpush1.bf16.msra.mxu0 %v838
          %862 = vmatprep.subr.bf16.mxu0 0
          %863 = vmatpush1.bf16.msra.mxu0 %v839
          %864 = vmatprep.subr.bf16.mxu0 0
          %865 = vmatpush1.bf16.msra.mxu0 0
          %866 = vmatprep.subr.bf16.mxu0 0
          %867 = vmatpush1.bf16.msra.mxu0 0
          %868 = vmatprep.subr.bf16.mxu0 0
          %869 = vmatpush1.bf16.msra.mxu0 0
          %870 = vmatprep.subr.bf16.mxu0 0
          %871 = vmatpush1.bf16.msra.mxu0 0
          %872 = vmatprep.subr.bf16.mxu0 0
          %873 = vmatpush1.bf16.msra.mxu0 0
          %874 = vmatprep.subr.bf16.mxu0 0
          %875 = vmatpush1.bf16.msra.mxu0 0
          %876 = vmatprep.subr.bf16.mxu0 0
          %877 = vmatpush1.bf16.msra.mxu0 0
          %878 = vmatprep.subr.bf16.mxu0 0
          %879 = vmatpush1.bf16.msra.mxu0 0
          %880 = vmatprep.mubr.bf16.mxu0 0
          %881 = vmatmul.mubr.bf16.gmra.mrb[0].mxu0 %v776
          %v882 = vpop.f32.mrb[0].mxu0
          %v883 = vadd.f32 %v798, %v882
          %v884 = vpop.f32.mrb[0].mxu0
          %v885 = vpop.f32.mrb[0].mxu0
          %v886 = vpop.f32.mrb[0].mxu0
          %887 = vdwg.mxu0
          %888 = vst [vmem:[%s338] sm:$0xff] %v883
        $region76: #{tpu_custom_call.1} parent=43 // pred_fallthru
          _
        %s889 = sand.u32 %s183, 1
        %s890 = scalar_lea.sflag [#allocation5], %s889
        %s891 = sand.u32 %s183, 1
        %s892 = smul.addr %s891, 8
        %s893 = scalar_lea.vmem [#allocation11], %s892
        // Predicated region
        $region77: #{tpu_custom_call.1} parent=43 // pred_check
          %p894 = pneg %p193
        $region78: #{tpu_custom_call.1} parent=43 // pred_check_branch
          %896 = sbr.rel (%p894) target = $region80
        $region79: #{tpu_custom_call.1} parent=43 // pred_region
          %s898 = ssub.s32 128, 128
          %899 = vsyncadd %s890, %s898
          %s900 = smul.addr %s29, 128
          %s901 = scalar_lea.hbm %s6, %s900
          %s903 = sshll.u32 %s893, 4
          %s904 = int_to_ptr.vmem [resolvable:$true] %s903
          %906 = dma.vmem_to_hbm [thread:$0]  %s904, 128, %s901, %s890
        $region80: #{tpu_custom_call.1} parent=43 // pred_fallthru
          _
      $region44: #{tpu_custom_call.1} parent=5 // pred_fallthru
        _
      %p907 = scmp.le.s32.totalorder 2, %s20
      // Predicated region
      $region81: #{tpu_custom_call.1} parent=5 // pred_check
        %p908 = pneg %p907
      $region82: #{tpu_custom_call.1} parent=5 // pred_check_branch
        %910 = sbr.rel (%p908) target = $region84
      $region83: #{tpu_custom_call.1} parent=5 // pred_region
        %s911 = ssub.s32 %s20, 2
        // Predicated region
        $region85: #{tpu_custom_call.1} parent=83 // pred_check
          %p912 = pneg %p199
        $region86: #{tpu_custom_call.1} parent=83 // pred_check_branch
          %914 = sbr.rel (%p912) target = $region88
        $region87: #{tpu_custom_call.1} parent=83 // pred_region
          %s915 = sand.u32 %s184, 1
          %s916 = scalar_lea.sflag [#allocation5], %s915
          %s917 = sand.u32 %s184, 1
          %s918 = smul.addr %s917, 8
          %s919 = scalar_lea.vmem [#allocation11], %s918
          %920 = dma.done %s916, 128
        $region88: #{tpu_custom_call.1} parent=83 // pred_fallthru
          _
      $region84: #{tpu_custom_call.1} parent=5 // pred_fallthru
        _
    $region6: #{tpu_custom_call.1} parent=1 // loop_footer
      %s24 = sadd.s32 1, %s20
    $region7: #{tpu_custom_call.1} parent=1 // loop_footer_branch
      %19 = sbr.rel target = $region3
    $region8: #{tpu_custom_call.1} parent=1 // loop_exit
      _
    %921 = vsyncpa [#allocation4], 1
    %s922 = scalar_lea.sflag [#allocation4], 1
    %923 = vsyncpa %s922, 1
    %924 = vsyncpa [#allocation7], 1
    %925 = vsyncpa [#allocation10], 1
    %926 = vsyncpa [#allocation5], 1
    %s927 = scalar_lea.sflag [#allocation5], 1
    %928 = vsyncpa %s927, 1

</llo_original>
